<compile_context>
chip_gen: v5e
topology: v5e:2x2
jax: 0.10.0
libtpu: 0.0.40
codegen_flags: <defaults>
</compile_context>

<pallas_src>
import math
import functools

import jax
import jax.numpy as jnp
from jax import lax
from jax.experimental import pallas as pl
from jax.experimental.pallas import tpu as pltpu


def _round_up(x, m):
    return (x + m - 1) // m * m


def _lstm_kernel(xh_ref, whh_ref, y_ref, h_sc, c_sc, *, block_t):
    """One grid step == `block_t` timesteps of the recurrence for one batch block.

    xh_ref:  (block_t, nb, 4*hp) f32   precomputed x@W_xh + (b_xh+b_hh), gate-padded
    whh_ref: (hp, 4*hp)          bf16  hidden->gates weights (VMEM resident)
    y_ref:   (block_t, nb, hp)   f32   outputs for this time block
    h_sc:    (nb, hp) bf16  carried hidden state (persists across time blocks)
    c_sc:    (nb, hp) f32   carried cell state
    """
    t_blk = pl.program_id(1)

    @pl.when(t_blk == 0)          # new batch block -> reset recurrent state
    def _():
        h_sc[...] = jnp.zeros_like(h_sc)
        c_sc[...] = jnp.zeros_like(c_sc)

    w_hh = whh_ref[...]           # hoisted once per grid step (resident bf16 tile)
    hp = h_sc.shape[-1]

    def sigmoid(v):
        # sigmoid(x) = 0.5 * (1 + tanh(x/2)): single EUP op, mul/add on VPU.
        return 0.5 * jnp.tanh(0.5 * v) + 0.5

    def step(s, carry):
        h_prev, c_prev = carry    # (nb, hp) bf16 / f32
        gates = xh_ref[s] + jnp.dot(h_prev, w_hh,
                                    preferred_element_type=jnp.float32)
        # hp is a multiple of 128 -> gate slices are lane-tile aligned (free).
        it = sigmoid(gates[:, 0 * hp:1 * hp])
        ft = sigmoid(gates[:, 1 * hp:2 * hp])
        gt = jnp.tanh(gates[:, 2 * hp:3 * hp])
        ot = sigmoid(gates[:, 3 * hp:4 * hp])
        ct = ft * c_prev + it * gt
        ht = ot * jnp.tanh(ct)
        y_ref[s] = ht.astype(y_ref.dtype)
        return ht.astype(h_sc.dtype), ct

    h_last, c_last = lax.fori_loop(0, block_t, step,
                                   (h_sc[...], c_sc[...]), unroll=True)
    h_sc[...] = h_last
    c_sc[...] = c_last


def lstm_forward(x, weight_xh, weight_hh, bias_xh, bias_hh, *,
                 block_t=4, max_block_n=256):
    """x: (n, tt, D) f32 -> y: (n, tt, h) f32 (PyTorch LSTM.forward semantics)."""
    n, tt, D = x.shape
    h = weight_hh.shape[0]
    assert weight_xh.shape == (D, 4 * h)
    assert weight_hh.shape == (h, 4 * h)

    hp = _round_up(h, 128)                        # lane-dense gates & outputs
    block_n = min(_round_up(n, 8), max_block_n)   # sublane-aligned batch tile
    n_pad = _round_up(n, block_n)
    block_t = min(block_t, tt)
    tt_pad = _round_up(tt, block_t)

    # --- Hoisted, time-independent input projection: one big MXU matmul in XLA,
    # with both biases folded in.  Gate blocks padded h -> hp with zeros so the
    # padded hidden/cell lanes stay identically zero through the recurrence.
    xh = jnp.einsum("ntd,dg->ntg", x, weight_xh) + (bias_xh + bias_hh)
    xh = xh.reshape(n, tt, 4, h)
    xh = jnp.pad(xh, ((0, n_pad - n), (0, tt_pad - tt), (0, 0), (0, hp - h)))
    xh = xh.reshape(n_pad, tt_pad, 4 * hp)
    xh_tm = jnp.transpose(xh, (1, 0, 2))          # time-major (tt_pad, n_pad, 4hp)

    # bf16 recurrent weight with the same per-gate padding.
    whh = weight_hh.reshape(h, 4, h)
    whh = jnp.pad(whh, ((0, hp - h), (0, 0), (0, hp - h)))
    whh = whh.reshape(hp, 4 * hp).astype(jnp.bfloat16)

    grid = (n_pad // block_n, tt_pad // block_t)

    # VMEM plan: double-buffered xh/y slabs + resident bf16 W_hh + h/c scratch.
    vmem_bytes = (2 * block_t * block_n * 4 * hp * 4      # xh slabs (f32)
                  + 2 * hp * 4 * hp * 2                   # W_hh (bf16)
                  + 2 * block_t * block_n * hp * 4        # y slabs (f32)
                  + block_n * hp * (2 + 4))               # h (bf16) + c (f32)
    vmem_limit = int(min(max(3 * vmem_bytes, 32 * 1024 * 1024),
                         64 * 1024 * 1024))

    kernel = functools.partial(_lstm_kernel, block_t=block_t)

    y_tm = pl.pallas_call(
        kernel,
        out_shape=jax.ShapeDtypeStruct((tt_pad, n_pad, hp), x.dtype),
        grid_spec=pltpu.PrefetchScalarGridSpec(
            num_scalar_prefetch=0,
            grid=grid,
            in_specs=[
                # Precomputed xh stream, block_t timesteps per grid step.
                pl.BlockSpec((block_t, block_n, 4 * hp),
                             lambda bi, ti: (ti, bi, 0)),
                # Resident recurrent weight (constant index_map -> fetched once).
                # TODO(synk): for large h, single-buffer this operand and/or
                # tile the 4*hp gate axis to fit v7x's 64 MiB VMEM.
                pl.BlockSpec((hp, 4 * hp), lambda bi, ti: (0, 0)),
            ],
            out_specs=pl.BlockSpec((block_t, block_n, hp),
                                   lambda bi, ti: (ti, bi, 0)),
            scratch_shapes=[
                pltpu.VMEM((block_n, hp), jnp.bfloat16),   # h_{t-1} (MXU operand)
                pltpu.VMEM((block_n, hp), jnp.float32),    # c_{t-1}
            ],
        ),
        compiler_params=pltpu.CompilerParams(
            # Batch blocks are independent (megacore-shardable); time is a
            # true recurrence and must stay sequential.
            dimension_semantics=("parallel", "arbitrary"),
            vmem_limit_bytes=vmem_limit,
        ),
    )(xh_tm, whh)

    y = jnp.transpose(y_tm, (1, 0, 2))            # (n_pad, tt_pad, hp)
    return y[:n, :tt, :h]


def lstm_reference(x, weight_xh, weight_hh, bias_xh, bias_hh):
    """Pure-JAX f32 reference mirroring the PyTorch forward loop."""
    n, tt, D = x.shape
    h = weight_hh.shape[0]
    ht = jnp.zeros((n, h), jnp.float32)
    ct = jnp.zeros((n, h), jnp.float32)
    ys = []
    for t in range(tt):
        xh = x[:, t, :] @ weight_xh + bias_xh
        hh = ht @ weight_hh + bias_hh
        g = xh + hh
        it = jax.nn.sigmoid(g[:, 0:h])
        ft = jax.nn.sigmoid(g[:, h:2 * h])
        gt = jnp.tanh(g[:, 2 * h:3 * h])
        ot = jax.nn.sigmoid(g[:, 3 * h:4 * h])
        ct = ft * ct + it * gt
        ht = ot * jnp.tanh(ct)
        ys.append(ht)
    return jnp.stack(ys, axis=1)


if __name__ == "__main__":
    # small shapes: batch n=2, seq tt=8, input D=16, hidden h=32
    n, tt, D, h = 2, 8, 16, 32
    std = 1.0 / math.sqrt(h)

    key = jax.random.PRNGKey(0)
    kx, kwxh, kwhh, kbxh, kbhh = jax.random.split(key, 5)

    x = jax.random.normal(kx, (n, tt, D), dtype=jnp.float32)
    weight_xh = jax.random.uniform(kwxh, (D, 4 * h), jnp.float32, -std, std)
    weight_hh = jax.random.uniform(kwhh, (h, 4 * h), jnp.float32, -std, std)
    bias_xh = jax.random.uniform(kbxh, (4 * h,), jnp.float32, -std, std)
    bias_hh = jax.random.uniform(kbhh, (4 * h,), jnp.float32, -std, std)

    y = lstm_forward(x, weight_xh, weight_hh, bias_xh, bias_hh, block_t=4)
    y = jax.block_until_ready(y)

    y_ref = lstm_reference(x, weight_xh, weight_hh, bias_xh, bias_hh)
    assert y.shape == (n, tt, h)
    # Recurrent matmul runs with bf16 MXU operands -> tolerance looser than f32.
    assert jnp.allclose(y, y_ref, atol=2e-2, rtol=2e-2), "mismatch vs reference"

    print("KERNEL_OK")
</pallas_src>

<mosaic_0001>
module attributes {stable_mosaic.version = 11 : i64} {
  func.func @_lstm_kernel(%arg0: i32, %arg1: i32, %arg2: memref<4x8x512xf32, #tpu.memory_space<vmem>>, %arg3: memref<128x512xbf16, #tpu.memory_space<vmem>>, %arg4: memref<4x8x128xf32, #tpu.memory_space<vmem>>, %arg5: memref<8x128xbf16, #tpu.memory_space<vmem>>, %arg6: memref<8x128xf32, #tpu.memory_space<vmem>>) attributes {dimension_semantics = [#tpu.dimension_semantics<parallel>, #tpu.dimension_semantics<arbitrary>], iteration_bounds = array<i64: 1, 2>, scalar_prefetch = 0 : i64, scratch_operands = 2 : i64, tpu.core_type = #tpu.core_type<tc>, window_params = [{transform_indices = @transform_0, window_bounds = array<i64: 4, 8, 512>}, {pipeline_mode = #tpu.pipeline_mode<synchronous>, transform_indices = @transform_1, window_bounds = array<i64: 128, 512>}, {transform_indices = @transform_2, window_bounds = array<i64: 4, 8, 128>}]} {
    %c0_i32 = arith.constant 0 : i32
    %0 = arith.cmpi eq, %arg1, %c0_i32 : i32
    %1 = arith.extui %0 : i1 to i32
    %c0_i32_0 = arith.constant 0 : i32
    %2 = arith.cmpi ne, %1, %c0_i32_0 : i32
    scf.if %2 {
      %cst_66 = arith.constant 0.000000e+00 : bf16
      %172 = vector.broadcast %cst_66 : bf16 to vector<8x128xbf16>
      %c0_67 = arith.constant 0 : index
      %c0_68 = arith.constant 0 : index
      %173 = vector.load %arg5[%c0_67, %c0_68] : memref<8x128xbf16, #tpu.memory_space<vmem>>, vector<8x128xbf16>
      tpu.vector_store %arg5[%c0_67, %c0_68], %172 {strides = array<i32>} : memref<8x128xbf16, #tpu.memory_space<vmem>>, vector<8x128xbf16>,
      %cst_69 = arith.constant 0.000000e+00 : f32
      %174 = vector.broadcast %cst_69 : f32 to vector<8x128xf32>
      %c0_70 = arith.constant 0 : index
      %c0_71 = arith.constant 0 : index
      %175 = vector.load %arg6[%c0_70, %c0_71] : memref<8x128xf32, #tpu.memory_space<vmem>>, vector<8x128xf32>
      tpu.vector_store %arg6[%c0_70, %c0_71], %174 {strides = array<i32>} : memref<8x128xf32, #tpu.memory_space<vmem>>, vector<8x128xf32>,
    } else {
    }
    %c0 = arith.constant 0 : index
    %c0_1 = arith.constant 0 : index
    %3 = vector.load %arg3[%c0, %c0_1] : memref<128x512xbf16, #tpu.memory_space<vmem>>, vector<128x512xbf16>
    %c0_2 = arith.constant 0 : index
    %c0_3 = arith.constant 0 : index
    %4 = vector.load %arg5[%c0_2, %c0_3] : memref<8x128xbf16, #tpu.memory_space<vmem>>, vector<8x128xbf16>
    %c0_4 = arith.constant 0 : index
    %c0_5 = arith.constant 0 : index
    %5 = vector.load %arg6[%c0_4, %c0_5] : memref<8x128xf32, #tpu.memory_space<vmem>>, vector<8x128xf32>
    %c0_i32_6 = arith.constant 0 : i32
    %6 = arith.index_cast %c0_i32_6 : i32 to index
    %c0_7 = arith.constant 0 : index
    %c0_8 = arith.constant 0 : index
    %7 = vector.load %arg2[%6, %c0_7, %c0_8] : memref<4x8x512xf32, #tpu.memory_space<vmem>>, vector<1x8x512xf32>
    %8 = vector.shape_cast %7 : vector<1x8x512xf32> to vector<8x512xf32>
    %cst = arith.constant dense<0.000000e+00> : vector<8x512xf32>
    %9 = tpu.matmul %4, %3, %cst {dimension_numbers = #tpu.dot_dimension_numbers<[1], [0], [0], [1], [0, 0, 1, 1], [], []>} : vector<8x128xbf16>, vector<128x512xbf16>, vector<8x512xf32> -> vector<8x512xf32>
    %10 = arith.addf %8, %9 : vector<8x512xf32>
    %11 = vector.extract_strided_slice %10 {offsets = [0, 0], sizes = [8, 128], strides = [1, 1]} : vector<8x512xf32> to vector<8x128xf32>
    %cst_9 = arith.constant 5.000000e-01 : f32
    %12 = vector.broadcast %cst_9 : f32 to vector<8x128xf32>
    %13 = arith.mulf %12, %11 : vector<8x128xf32>
    %14 = math.tanh %13 : vector<8x128xf32>
    %cst_10 = arith.constant 5.000000e-01 : f32
    %15 = vector.broadcast %cst_10 : f32 to vector<8x128xf32>
    %16 = arith.mulf %15, %14 : vector<8x128xf32>
    %cst_11 = arith.constant 5.000000e-01 : f32
    %17 = vector.broadcast %cst_11 : f32 to vector<8x128xf32>
    %18 = arith.addf %16, %17 : vector<8x128xf32>
    %19 = vector.extract_strided_slice %10 {offsets = [0, 128], sizes = [8, 128], strides = [1, 1]} : vector<8x512xf32> to vector<8x128xf32>
    %cst_12 = arith.constant 5.000000e-01 : f32
    %20 = vector.broadcast %cst_12 : f32 to vector<8x128xf32>
    %21 = arith.mulf %20, %19 : vector<8x128xf32>
    %22 = math.tanh %21 : vector<8x128xf32>
    %cst_13 = arith.constant 5.000000e-01 : f32
    %23 = vector.broadcast %cst_13 : f32 to vector<8x128xf32>
    %24 = arith.mulf %23, %22 : vector<8x128xf32>
    %cst_14 = arith.constant 5.000000e-01 : f32
    %25 = vector.broadcast %cst_14 : f32 to vector<8x128xf32>
    %26 = arith.addf %24, %25 : vector<8x128xf32>
    %27 = vector.extract_strided_slice %10 {offsets = [0, 256], sizes = [8, 128], strides = [1, 1]} : vector<8x512xf32> to vector<8x128xf32>
    %28 = math.tanh %27 : vector<8x128xf32>
    %29 = vector.extract_strided_slice %10 {offsets = [0, 384], sizes = [8, 128], strides = [1, 1]} : vector<8x512xf32> to vector<8x128xf32>
    %cst_15 = arith.constant 5.000000e-01 : f32
    %30 = vector.broadcast %cst_15 : f32 to vector<8x128xf32>
    %31 = arith.mulf %30, %29 : vector<8x128xf32>
    %32 = math.tanh %31 : vector<8x128xf32>
    %cst_16 = arith.constant 5.000000e-01 : f32
    %33 = vector.broadcast %cst_16 : f32 to vector<8x128xf32>
    %34 = arith.mulf %33, %32 : vector<8x128xf32>
    %cst_17 = arith.constant 5.000000e-01 : f32
    %35 = vector.broadcast %cst_17 : f32 to vector<8x128xf32>
    %36 = arith.addf %34, %35 : vector<8x128xf32>
    %37 = arith.mulf %26, %5 : vector<8x128xf32>
    %38 = arith.mulf %18, %28 : vector<8x128xf32>
    %39 = arith.addf %37, %38 : vector<8x128xf32>
    %40 = math.tanh %39 : vector<8x128xf32>
    %41 = arith.mulf %36, %40 : vector<8x128xf32>
    %42 = arith.index_cast %c0_i32_6 : i32 to index
    %c0_18 = arith.constant 0 : index
    %c0_19 = arith.constant 0 : index
    %43 = vector.load %arg4[%42, %c0_18, %c0_19] : memref<4x8x128xf32, #tpu.memory_space<vmem>>, vector<1x8x128xf32>
    %44 = vector.shape_cast %43 : vector<1x8x128xf32> to vector<8x128xf32>
    %45 = vector.shape_cast %41 : vector<8x128xf32> to vector<1x8x128xf32>
    tpu.vector_store %arg4[%42, %c0_18, %c0_19], %45 {strides = array<i32>} : memref<4x8x128xf32, #tpu.memory_space<vmem>>, vector<1x8x128xf32>,
    %46 = arith.truncf %41 : vector<8x128xf32> to vector<8x128xbf16>
    %c1_i32 = arith.constant 1 : i32
    %47 = arith.index_cast %c1_i32 : i32 to index
    %c0_20 = arith.constant 0 : index
    %c0_21 = arith.constant 0 : index
    %48 = vector.load %arg2[%47, %c0_20, %c0_21] : memref<4x8x512xf32, #tpu.memory_space<vmem>>, vector<1x8x512xf32>
    %49 = vector.shape_cast %48 : vector<1x8x512xf32> to vector<8x512xf32>
    %cst_22 = arith.constant dense<0.000000e+00> : vector<8x512xf32>
    %50 = tpu.matmul %46, %3, %cst_22 {dimension_numbers = #tpu.dot_dimension_numbers<[1], [0], [0], [1], [0, 0, 1, 1], [], []>} : vector<8x128xbf16>, vector<128x512xbf16>, vector<8x512xf32> -> vector<8x512xf32>
    %51 = arith.addf %49, %50 : vector<8x512xf32>
    %52 = vector.extract_strided_slice %51 {offsets = [0, 0], sizes = [8, 128], strides = [1, 1]} : vector<8x512xf32> to vector<8x128xf32>
    %cst_23 = arith.constant 5.000000e-01 : f32
    %53 = vector.broadcast %cst_23 : f32 to vector<8x128xf32>
    %54 = arith.mulf %53, %52 : vector<8x128xf32>
    %55 = math.tanh %54 : vector<8x128xf32>
    %cst_24 = arith.constant 5.000000e-01 : f32
    %56 = vector.broadcast %cst_24 : f32 to vector<8x128xf32>
    %57 = arith.mulf %56, %55 : vector<8x128xf32>
    %cst_25 = arith.constant 5.000000e-01 : f32
    %58 = vector.broadcast %cst_25 : f32 to vector<8x128xf32>
    %59 = arith.addf %57, %58 : vector<8x128xf32>
    %60 = vector.extract_strided_slice %51 {offsets = [0, 128], sizes = [8, 128], strides = [1, 1]} : vector<8x512xf32> to vector<8x128xf32>
    %cst_26 = arith.constant 5.000000e-01 : f32
    %61 = vector.broadcast %cst_26 : f32 to vector<8x128xf32>
    %62 = arith.mulf %61, %60 : vector<8x128xf32>
    %63 = math.tanh %62 : vector<8x128xf32>
    %cst_27 = arith.constant 5.000000e-01 : f32
    %64 = vector.broadcast %cst_27 : f32 to vector<8x128xf32>
    %65 = arith.mulf %64, %63 : vector<8x128xf32>
    %cst_28 = arith.constant 5.000000e-01 : f32
    %66 = vector.broadcast %cst_28 : f32 to vector<8x128xf32>
    %67 = arith.addf %65, %66 : vector<8x128xf32>
    %68 = vector.extract_strided_slice %51 {offsets = [0, 256], sizes = [8, 128], strides = [1, 1]} : vector<8x512xf32> to vector<8x128xf32>
    %69 = math.tanh %68 : vector<8x128xf32>
    %70 = vector.extract_strided_slice %51 {offsets = [0, 384], sizes = [8, 128], strides = [1, 1]} : vector<8x512xf32> to vector<8x128xf32>
    %cst_29 = arith.constant 5.000000e-01 : f32
    %71 = vector.broadcast %cst_29 : f32 to vector<8x128xf32>
    %72 = arith.mulf %71, %70 : vector<8x128xf32>
    %73 = math.tanh %72 : vector<8x128xf32>
    %cst_30 = arith.constant 5.000000e-01 : f32
    %74 = vector.broadcast %cst_30 : f32 to vector<8x128xf32>
    %75 = arith.mulf %74, %73 : vector<8x128xf32>
    %cst_31 = arith.constant 5.000000e-01 : f32
    %76 = vector.broadcast %cst_31 : f32 to vector<8x128xf32>
    %77 = arith.addf %75, %76 : vector<8x128xf32>
    %78 = arith.mulf %67, %39 : vector<8x128xf32>
    %79 = arith.mulf %59, %69 : vector<8x128xf32>
    %80 = arith.addf %78, %79 : vector<8x128xf32>
    %81 = math.tanh %80 : vector<8x128xf32>
    %82 = arith.mulf %77, %81 : vector<8x128xf32>
    %83 = arith.index_cast %c1_i32 : i32 to index
    %c0_32 = arith.constant 0 : index
    %c0_33 = arith.constant 0 : index
    %84 = vector.load %arg4[%83, %c0_32, %c0_33] : memref<4x8x128xf32, #tpu.memory_space<vmem>>, vector<1x8x128xf32>
    %85 = vector.shape_cast %84 : vector<1x8x128xf32> to vector<8x128xf32>
    %86 = vector.shape_cast %82 : vector<8x128xf32> to vector<1x8x128xf32>
    tpu.vector_store %arg4[%83, %c0_32, %c0_33], %86 {strides = array<i32>} : memref<4x8x128xf32, #tpu.memory_space<vmem>>, vector<1x8x128xf32>,
    %87 = arith.truncf %82 : vector<8x128xf32> to vector<8x128xbf16>
    %c2_i32 = arith.constant 2 : i32
    %88 = arith.index_cast %c2_i32 : i32 to index
    %c0_34 = arith.constant 0 : index
    %c0_35 = arith.constant 0 : index
    %89 = vector.load %arg2[%88, %c0_34, %c0_35] : memref<4x8x512xf32, #tpu.memory_space<vmem>>, vector<1x8x512xf32>
    %90 = vector.shape_cast %89 : vector<1x8x512xf32> to vector<8x512xf32>
    %cst_36 = arith.constant dense<0.000000e+00> : vector<8x512xf32>
    %91 = tpu.matmul %87, %3, %cst_36 {dimension_numbers = #tpu.dot_dimension_numbers<[1], [0], [0], [1], [0, 0, 1, 1], [], []>} : vector<8x128xbf16>, vector<128x512xbf16>, vector<8x512xf32> -> vector<8x512xf32>
    %92 = arith.addf %90, %91 : vector<8x512xf32>
    %93 = vector.extract_strided_slice %92 {offsets = [0, 0], sizes = [8, 128], strides = [1, 1]} : vector<8x512xf32> to vector<8x128xf32>
    %cst_37 = arith.constant 5.000000e-01 : f32
    %94 = vector.broadcast %cst_37 : f32 to vector<8x128xf32>
    %95 = arith.mulf %94, %93 : vector<8x128xf32>
    %96 = math.tanh %95 : vector<8x128xf32>
    %cst_38 = arith.constant 5.000000e-01 : f32
    %97 = vector.broadcast %cst_38 : f32 to vector<8x128xf32>
    %98 = arith.mulf %97, %96 : vector<8x128xf32>
    %cst_39 = arith.constant 5.000000e-01 : f32
    %99 = vector.broadcast %cst_39 : f32 to vector<8x128xf32>
    %100 = arith.addf %98, %99 : vector<8x128xf32>
    %101 = vector.extract_strided_slice %92 {offsets = [0, 128], sizes = [8, 128], strides = [1, 1]} : vector<8x512xf32> to vector<8x128xf32>
    %cst_40 = arith.constant 5.000000e-01 : f32
    %102 = vector.broadcast %cst_40 : f32 to vector<8x128xf32>
    %103 = arith.mulf %102, %101 : vector<8x128xf32>
    %104 = math.tanh %103 : vector<8x128xf32>
    %cst_41 = arith.constant 5.000000e-01 : f32
    %105 = vector.broadcast %cst_41 : f32 to vector<8x128xf32>
    %106 = arith.mulf %105, %104 : vector<8x128xf32>
    %cst_42 = arith.constant 5.000000e-01 : f32
    %107 = vector.broadcast %cst_42 : f32 to vector<8x128xf32>
    %108 = arith.addf %106, %107 : vector<8x128xf32>
    %109 = vector.extract_strided_slice %92 {offsets = [0, 256], sizes = [8, 128], strides = [1, 1]} : vector<8x512xf32> to vector<8x128xf32>
    %110 = math.tanh %109 : vector<8x128xf32>
    %111 = vector.extract_strided_slice %92 {offsets = [0, 384], sizes = [8, 128], strides = [1, 1]} : vector<8x512xf32> to vector<8x128xf32>
    %cst_43 = arith.constant 5.000000e-01 : f32
    %112 = vector.broadcast %cst_43 : f32 to vector<8x128xf32>
    %113 = arith.mulf %112, %111 : vector<8x128xf32>
    %114 = math.tanh %113 : vector<8x128xf32>
    %cst_44 = arith.constant 5.000000e-01 : f32
    %115 = vector.broadcast %cst_44 : f32 to vector<8x128xf32>
    %116 = arith.mulf %115, %114 : vector<8x128xf32>
    %cst_45 = arith.constant 5.000000e-01 : f32
    %117 = vector.broadcast %cst_45 : f32 to vector<8x128xf32>
    %118 = arith.addf %116, %117 : vector<8x128xf32>
    %119 = arith.mulf %108, %80 : vector<8x128xf32>
    %120 = arith.mulf %100, %110 : vector<8x128xf32>
    %121 = arith.addf %119, %120 : vector<8x128xf32>
    %122 = math.tanh %121 : vector<8x128xf32>
    %123 = arith.mulf %118, %122 : vector<8x128xf32>
    %124 = arith.index_cast %c2_i32 : i32 to index
    %c0_46 = arith.constant 0 : index
    %c0_47 = arith.constant 0 : index
    %125 = vector.load %arg4[%124, %c0_46, %c0_47] : memref<4x8x128xf32, #tpu.memory_space<vmem>>, vector<1x8x128xf32>
    %126 = vector.shape_cast %125 : vector<1x8x128xf32> to vector<8x128xf32>
    %127 = vector.shape_cast %123 : vector<8x128xf32> to vector<1x8x128xf32>
    tpu.vector_store %arg4[%124, %c0_46, %c0_47], %127 {strides = array<i32>} : memref<4x8x128xf32, #tpu.memory_space<vmem>>, vector<1x8x128xf32>,
    %128 = arith.truncf %123 : vector<8x128xf32> to vector<8x128xbf16>
    %c3_i32 = arith.constant 3 : i32
    %129 = arith.index_cast %c3_i32 : i32 to index
    %c0_48 = arith.constant 0 : index
    %c0_49 = arith.constant 0 : index
    %130 = vector.load %arg2[%129, %c0_48, %c0_49] : memref<4x8x512xf32, #tpu.memory_space<vmem>>, vector<1x8x512xf32>
    %131 = vector.shape_cast %130 : vector<1x8x512xf32> to vector<8x512xf32>
    %cst_50 = arith.constant dense<0.000000e+00> : vector<8x512xf32>
    %132 = tpu.matmul %128, %3, %cst_50 {dimension_numbers = #tpu.dot_dimension_numbers<[1], [0], [0], [1], [0, 0, 1, 1], [], []>} : vector<8x128xbf16>, vector<128x512xbf16>, vector<8x512xf32> -> vector<8x512xf32>
    %133 = arith.addf %131, %132 : vector<8x512xf32>
    %134 = vector.extract_strided_slice %133 {offsets = [0, 0], sizes = [8, 128], strides = [1, 1]} : vector<8x512xf32> to vector<8x128xf32>
    %cst_51 = arith.constant 5.000000e-01 : f32
    %135 = vector.broadcast %cst_51 : f32 to vector<8x128xf32>
    %136 = arith.mulf %135, %134 : vector<8x128xf32>
    %137 = math.tanh %136 : vector<8x128xf32>
    %cst_52 = arith.constant 5.000000e-01 : f32
    %138 = vector.broadcast %cst_52 : f32 to vector<8x128xf32>
    %139 = arith.mulf %138, %137 : vector<8x128xf32>
    %cst_53 = arith.constant 5.000000e-01 : f32
    %140 = vector.broadcast %cst_53 : f32 to vector<8x128xf32>
    %141 = arith.addf %139, %140 : vector<8x128xf32>
    %142 = vector.extract_strided_slice %133 {offsets = [0, 128], sizes = [8, 128], strides = [1, 1]} : vector<8x512xf32> to vector<8x128xf32>
    %cst_54 = arith.constant 5.000000e-01 : f32
    %143 = vector.broadcast %cst_54 : f32 to vector<8x128xf32>
    %144 = arith.mulf %143, %142 : vector<8x128xf32>
    %145 = math.tanh %144 : vector<8x128xf32>
    %cst_55 = arith.constant 5.000000e-01 : f32
    %146 = vector.broadcast %cst_55 : f32 to vector<8x128xf32>
    %147 = arith.mulf %146, %145 : vector<8x128xf32>
    %cst_56 = arith.constant 5.000000e-01 : f32
    %148 = vector.broadcast %cst_56 : f32 to vector<8x128xf32>
    %149 = arith.addf %147, %148 : vector<8x128xf32>
    %150 = vector.extract_strided_slice %133 {offsets = [0, 256], sizes = [8, 128], strides = [1, 1]} : vector<8x512xf32> to vector<8x128xf32>
    %151 = math.tanh %150 : vector<8x128xf32>
    %152 = vector.extract_strided_slice %133 {offsets = [0, 384], sizes = [8, 128], strides = [1, 1]} : vector<8x512xf32> to vector<8x128xf32>
    %cst_57 = arith.constant 5.000000e-01 : f32
    %153 = vector.broadcast %cst_57 : f32 to vector<8x128xf32>
    %154 = arith.mulf %153, %152 : vector<8x128xf32>
    %155 = math.tanh %154 : vector<8x128xf32>
    %cst_58 = arith.constant 5.000000e-01 : f32
    %156 = vector.broadcast %cst_58 : f32 to vector<8x128xf32>
    %157 = arith.mulf %156, %155 : vector<8x128xf32>
    %cst_59 = arith.constant 5.000000e-01 : f32
    %158 = vector.broadcast %cst_59 : f32 to vector<8x128xf32>
    %159 = arith.addf %157, %158 : vector<8x128xf32>
    %160 = arith.mulf %149, %121 : vector<8x128xf32>
    %161 = arith.mulf %141, %151 : vector<8x128xf32>
    %162 = arith.addf %160, %161 : vector<8x128xf32>
    %163 = math.tanh %162 : vector<8x128xf32>
    %164 = arith.mulf %159, %163 : vector<8x128xf32>
    %165 = arith.index_cast %c3_i32 : i32 to index
    %c0_60 = arith.constant 0 : index
    %c0_61 = arith.constant 0 : index
    %166 = vector.load %arg4[%165, %c0_60, %c0_61] : memref<4x8x128xf32, #tpu.memory_space<vmem>>, vector<1x8x128xf32>
    %167 = vector.shape_cast %166 : vector<1x8x128xf32> to vector<8x128xf32>
    %168 = vector.shape_cast %164 : vector<8x128xf32> to vector<1x8x128xf32>
    tpu.vector_store %arg4[%165, %c0_60, %c0_61], %168 {strides = array<i32>} : memref<4x8x128xf32, #tpu.memory_space<vmem>>, vector<1x8x128xf32>,
    %169 = arith.truncf %164 : vector<8x128xf32> to vector<8x128xbf16>
    %c4_i32 = arith.constant 4 : i32
    %c0_62 = arith.constant 0 : index
    %c0_63 = arith.constant 0 : index
    %170 = vector.load %arg5[%c0_62, %c0_63] : memref<8x128xbf16, #tpu.memory_space<vmem>>, vector<8x128xbf16>
    tpu.vector_store %arg5[%c0_62, %c0_63], %169 {strides = array<i32>} : memref<8x128xbf16, #tpu.memory_space<vmem>>, vector<8x128xbf16>,
    %c0_64 = arith.constant 0 : index
    %c0_65 = arith.constant 0 : index
    %171 = vector.load %arg6[%c0_64, %c0_65] : memref<8x128xf32, #tpu.memory_space<vmem>>, vector<8x128xf32>
    tpu.vector_store %arg6[%c0_64, %c0_65], %162 {strides = array<i32>} : memref<8x128xf32, #tpu.memory_space<vmem>>, vector<8x128xf32>,
    return
  }
  func.func @transform_0(%arg0: i32, %arg1: i32) -> (i32, i32, i32) {
    %c0_i32 = arith.constant 0 : i32
    %c0_i32_0 = arith.constant 0 : i32
    return %arg1, %arg0, %c0_i32 : i32, i32, i32
  }
  func.func @transform_1(%arg0: i32, %arg1: i32) -> (i32, i32) {
    %c0_i32 = arith.constant 0 : i32
    %c0_i32_0 = arith.constant 0 : i32
    %c0_i32_1 = arith.constant 0 : i32
    return %c0_i32, %c0_i32_0 : i32, i32
  }
  func.func @transform_2(%arg0: i32, %arg1: i32) -> (i32, i32, i32) {
    %c0_i32 = arith.constant 0 : i32
    %c0_i32_0 = arith.constant 0 : i32
    return %arg1, %arg0, %c0_i32 : i32, i32, i32
  }
}

</mosaic_0001>

<llo_original>
// kernel: tpu_custom_call.1
$region0: #{tpu_custom_call.1}
  #allocation0 [shape = 'u32[]', space=smem, size = 0x4, offset = 0x4, fixed_abs, tag = 'smem constant byte address 0x4 - core index']
  #allocation1 [shape = 'u32[72,128]{1,0:T(1,128)}', space=vmem, size = 0x9000, scoped, tag = 'internal scratch']
  #allocation2 [shape = 'bf16[8,128]{1,0:T(8,128)(2,1)}', space=vmem, size = 0x800, scoped, tag = 'scratch operand']
  #allocation3 [shape = 'f32[8,128]{1,0:T(8,128)}', space=vmem, size = 0x1000, scoped, tag = 'scratch operand']
  %s0 = inlined_call_operand.hbm [shape: f32[8,8,512], index: 0, kind: input, shape index: {}]
  %s1 = inlined_call_operand.hbm [shape: bf16[128,512], index: 1, kind: input, shape index: {}]
  %s2 = inlined_call_operand.hbm [shape: f32[8,8,128], index: 2, kind: output, shape index: {}]
  %s3 = sld [smem:[#allocation0]]
  $region53: #{tpu_custom_call.1} parent=0
    _
  %s5 = ssub.s32 1, %s3
  %s6 = scalar_select 0, %s5, %s3
  $region1: #{tpu_custom_call.1} parent=0
    #allocation4 [shape = 'u8[131072]{0}', space=vmem, size = 0x20000, scoped, tag = 'input window, operand 0']
    #allocation5 [shape = 's32[2]{0}', space=sflag, size = 0x8, scoped, tag = 'scoped memory for tpu_custom_call.1']
    #allocation6 [shape = 's32[2]{0}', space=sflag, size = 0x8, scoped, tag = 'scoped memory for tpu_custom_call.1']
    #allocation7 [shape = 'u8[131072]{0}', space=vmem, size = 0x20000, scoped, tag = 'input window, operand 1, single buffered']
    #allocation8 [shape = 's32[1]{0}', space=sflag, size = 0x4, scoped, tag = 'scoped memory for tpu_custom_call.1']
    #allocation9 [shape = 'u8[32768]{0}', space=vmem, size = 0x8000, scoped, tag = 'output window, operand 0']
    %7 = vsyncpa [#allocation5], 0
    %s8 = scalar_lea.sflag [#allocation5], 1
    %9 = vsyncpa %s8, 0
    %10 = vsyncpa [#allocation8], 0
    %11 = vsyncpa [#allocation6], 0
    %s12 = scalar_lea.sflag [#allocation6], 1
    %13 = vsyncpa %s12, 0
    loop: start=0, step=1, limit=4
    $region2: #{tpu_custom_call.1} parent=1 // loop_pre_header
      _
    $region3: #{tpu_custom_call.1} parent=1 // loop_header
      %s15 = sphi 0, %s19
      %p16 = scmp.ge.s32.totalorder %s15, 4
      %s22 = sphi 0, %s34
      %s23 = sphi 0, %s30
      %s24 = sphi 0, %s22
      %s25 = sphi 0, %s23
      %s26 = sphi 0, %s24
      %s27 = sphi 0, %s25
      %s39 = sphi 0, %s41
      %s42 = sphi 0, %s39
      %s43 = sphi 0, %s42
      %s59 = sphi 0, %s43
      %s63 = sphi 0, %s63
      %s65 = sphi 0, %s63
      %s66 = sphi 0, %s65
      %s80 = sphi 0, %s66
      %s88 = sphi 0, %s90
      %s91 = sphi 0, %s88
      %s92 = sphi 0, %s91
      %s108 = sphi 0, %s92
    $region4: #{tpu_custom_call.1} parent=1 // loop_header_branch
      %18 = sbr.rel (%p16) target = $region8
    $region5: #{tpu_custom_call.1} parent=1 // loop_body
      %s20 = ssub.s32 %s15, 1
      %s21 = ssub.s32 %s15, 2
      %s28 = sadd.s32 1, %s23
      %p29 = scmp.ge.s32.totalorder %s28, 2
      %s30 = scalar_select %p29, 0, %s28
      %s31 = sadd.s32 1, %s22
      %s32 = scalar_select %p29, %s31, %s22
      %p33 = scmp.ge.s32.totalorder %s32, 1
      %s34 = scalar_select %p33, 0, %s32
      %s35 = ssub.s32 %s23, %s30
      %s36 = ssub.s32 %s22, %s34
      %s37 = sor.u32 %s35, %s36
      %p38 = scmp.eq.s32.totalorder %s37, 0
      %s40 = sadd.s32 %s39, 1
      %s41 = scalar_select %p38, %s39, %s40
      %p44 = pneg %p38
      %p45 = scmp.eq.s32.totalorder %s15, 1
      %p46 = por %p44, %p45
      %p47 = scmp.ne.s32.totalorder %s39, %s42
      %p48 = scmp.eq.s32.totalorder %s15, 0
      %p49 = por %p47, %p48
      %p50 = scmp.ne.s32.totalorder %s39, %s42
      %p51 = scmp.eq.s32.totalorder %s20, 1
      %p52 = por %p50, %p51
      %p53 = scmp.ne.s32.totalorder %s42, %s43
      %p54 = scmp.eq.s32.totalorder %s20, 0
      %p55 = por %p53, %p54
      %p56 = scmp.ne.s32.totalorder %s42, %s43
      %p57 = scmp.eq.s32.totalorder %s21, 1
      %p58 = por %p56, %p57
      %p60 = scmp.ne.s32.totalorder %s43, %s59
      %p61 = scmp.eq.s32.totalorder %s21, 0
      %p62 = por %p60, %p61
      %s64 = sadd.s32 %s63, 1
      %p67 = scmp.eq.s32.totalorder %s15, 1
      %p68 = scmp.ne.s32.totalorder %s63, %s65
      %p69 = scmp.eq.s32.totalorder %s15, 0
      %p70 = por %p68, %p69
      %p71 = scmp.ne.s32.totalorder %s63, %s65
      %p72 = scmp.eq.s32.totalorder %s20, 1
      %p73 = por %p71, %p72
      %p74 = scmp.ne.s32.totalorder %s65, %s66
      %p75 = scmp.eq.s32.totalorder %s20, 0
      %p76 = por %p74, %p75
      %p77 = scmp.ne.s32.totalorder %s65, %s66
      %p78 = scmp.eq.s32.totalorder %s21, 1
      %p79 = por %p77, %p78
      %p81 = scmp.ne.s32.totalorder %s66, %s80
      %p82 = scmp.eq.s32.totalorder %s21, 0
      %p83 = por %p81, %p82
      %s84 = ssub.s32 %s23, %s30
      %s85 = ssub.s32 %s22, %s34
      %s86 = sor.u32 %s84, %s85
      %p87 = scmp.eq.s32.totalorder %s86, 0
      %s89 = sadd.s32 %s88, 1
      %s90 = scalar_select %p87, %s88, %s89
      %p93 = pneg %p87
      %p94 = scmp.eq.s32.totalorder %s15, 1
      %p95 = por %p93, %p94
      %p96 = scmp.ne.s32.totalorder %s88, %s91
      %p97 = scmp.eq.s32.totalorder %s15, 0
      %p98 = por %p96, %p97
      %p99 = scmp.ne.s32.totalorder %s88, %s91
      %p100 = scmp.eq.s32.totalorder %s20, 1
      %p101 = por %p99, %p100
      %p102 = scmp.ne.s32.totalorder %s91, %s92
      %p103 = scmp.eq.s32.totalorder %s20, 0
      %p104 = por %p102, %p103
      %p105 = scmp.ne.s32.totalorder %s91, %s92
      %p106 = scmp.eq.s32.totalorder %s21, 1
      %p107 = por %p105, %p106
      %p109 = scmp.ne.s32.totalorder %s92, %s108
      %p110 = scmp.eq.s32.totalorder %s21, 0
      %p111 = por %p109, %p110
      %p112 = scmp.le.s32.totalorder 1, %s15
      %p113 = scmp.lt.s32.totalorder %s15, 3
      %p114 = pnand %p112, %p113
      %p115 = pneg %p114
      // Predicated region
      $region9: #{tpu_custom_call.1} parent=5 // pred_check
        _
      $region10: #{tpu_custom_call.1} parent=5 // pred_check_branch
        %117 = sbr.rel (%p114) target = $region12
      $region11: #{tpu_custom_call.1} parent=5 // pred_region
        %s118 = ssub.s32 %s15, 1
        // Predicated region
        $region13: #{tpu_custom_call.1} parent=11 // pred_check
          %p119 = pneg %p76
        $region14: #{tpu_custom_call.1} parent=11 // pred_check_branch
          %121 = sbr.rel (%p119) target = $region16
        $region15: #{tpu_custom_call.1} parent=11 // pred_region
          %123 = vsyncadd [#allocation8], 0
          %s124 = sshll.u32 %s1, 4
          %s125 = int_to_ptr.hbm [resolvable:$true] %s124
          %s126 = sshll.u32 [#allocation7], 4
          %s127 = int_to_ptr.vmem [resolvable:$true] %s126
          %132 = dma.hbm_to_vmem [thread:$0]  %s125, 4096, %s127, [#allocation8], 256, 256, 16
        $region16: #{tpu_custom_call.1} parent=11 // pred_fallthru
          _
      $region12: #{tpu_custom_call.1} parent=5 // pred_fallthru
        _
      %p133 = scmp.lt.s32.totalorder %s15, 2
      // Predicated region
      $region17: #{tpu_custom_call.1} parent=5 // pred_check
        %p134 = pneg %p133
      $region18: #{tpu_custom_call.1} parent=5 // pred_check_branch
        %136 = sbr.rel (%p134) target = $region20
      $region19: #{tpu_custom_call.1} parent=5 // pred_region
        // Predicated region
        $region21: #{tpu_custom_call.1} parent=19 // pred_check
          %p137 = pneg %p49
        $region22: #{tpu_custom_call.1} parent=19 // pred_check_branch
          %139 = sbr.rel (%p137) target = $region24
        $region23: #{tpu_custom_call.1} parent=19 // pred_region
          %s140 = sand.u32 %s39, 1
          %s141 = scalar_lea.sflag [#allocation5], %s140
          %s142 = sand.u32 %s39, 1
          %s143 = smul.addr %s142, 128
          %s144 = scalar_lea.vmem [#allocation4], %s143
          %s145 = smul.u32 4, %s23
          %147 = vsyncadd %s141, 0
          %s148 = smul.addr %s22, 4
          %s149 = smul.addr %s145, 4
          %s150 = sadd.s32 %s148, %s149
          %s151 = smul.addr %s150, 8
          %s152 = scalar_lea.hbm %s0, %s151
          %s153 = sshll.u32 %s152, 4
          %s154 = int_to_ptr.hbm [resolvable:$true] %s153
          %s155 = sshll.u32 %s144, 4
          %s156 = int_to_ptr.vmem [resolvable:$true] %s155
          %161 = dma.hbm_to_vmem [thread:$0]  %s154, 2048, %s156, %s141, 512, 512, 32
        $region24: #{tpu_custom_call.1} parent=19 // pred_fallthru
          _
      $region20: #{tpu_custom_call.1} parent=5 // pred_fallthru
        _
      %p162 = scmp.le.s32.totalorder 1, %s15
      %p163 = scmp.lt.s32.totalorder %s15, 3
      %p164 = pnand %p162, %p163
      %p165 = pneg %p164
      // Predicated region
      $region25: #{tpu_custom_call.1} parent=5 // pred_check
        _
      $region26: #{tpu_custom_call.1} parent=5 // pred_check_branch
        %167 = sbr.rel (%p164) target = $region28
      $region27: #{tpu_custom_call.1} parent=5 // pred_region
        %s168 = ssub.s32 %s15, 1
        %s169 = sand.u32 %s42, 1
        %s170 = scalar_lea.sflag [#allocation5], %s169
        %s171 = sand.u32 %s42, 1
        %s172 = smul.addr %s171, 128
        %s173 = scalar_lea.vmem [#allocation4], %s172
        // Predicated region
        $region29: #{tpu_custom_call.1} parent=27 // pred_check
          %p174 = pneg %p55
        $region30: #{tpu_custom_call.1} parent=27 // pred_check_branch
          %176 = sbr.rel (%p174) target = $region32
        $region31: #{tpu_custom_call.1} parent=27 // pred_region
          %178 = dma.done %s170, 2048
        $region32: #{tpu_custom_call.1} parent=27 // pred_fallthru
          _
        // Predicated region
        $region33: #{tpu_custom_call.1} parent=27 // pred_check
          %p179 = pneg %p76
        $region34: #{tpu_custom_call.1} parent=27 // pred_check_branch
          %181 = sbr.rel (%p179) target = $region36
        $region35: #{tpu_custom_call.1} parent=27 // pred_region
          %183 = dma.done [#allocation8], 4096
        $region36: #{tpu_custom_call.1} parent=27 // pred_fallthru
          _
        %s184 = sand.u32 %s42, 1
        %s185 = scalar_lea.sflag [#allocation5], %s184
        %s186 = sand.u32 %s42, 1
        %s187 = smul.addr %s186, 128
        %s188 = scalar_lea.vmem [#allocation4], %s187
        %p189 = pneg %p55
        %p190 = pneg %p52
        %p191 = pneg %p76
        %p192 = pneg %p73
        %p193 = pneg %p104
        %p194 = pneg %p101
        %s195 = sand.u32 %s91, 1
        %s196 = scalar_lea.sflag [#allocation6], %s195
        %s197 = sand.u32 %s91, 1
        %s198 = smul.addr %s197, 32
        %s199 = scalar_lea.vmem [#allocation9], %s198
        %s200 = smul.u32 4, %s25
        %s201 = smul.u32 4, %s25
        %p203 = scmp.eq.s32.totalorder %s25, 0
        // Predicated region
        $region37: #{tpu_custom_call.1} parent=27 // pred_check
          %p204 = pneg %p203
        $region38: #{tpu_custom_call.1} parent=27 // pred_check_branch
          %206 = sbr.rel (%p204) target = $region40
        $region39: #{tpu_custom_call.1} parent=27 // pred_region
          %207 = vst [vmem:[#allocation2] sm:$0xf] 0
          %208 = vst [vmem:[#allocation3] sm:$0xff] 0.0
        $region40: #{tpu_custom_call.1} parent=27 // pred_fallthru
          _
        %v209 = vld [vmem:[#allocation7] sm:$0xff]
        %v210 = vld [vmem:[#allocation7 + $0x8] sm:$0xff]
        %v211 = vld [vmem:[#allocation7 + $0x10] sm:$0xff]
        %v212 = vld [vmem:[#allocation7 + $0x18] sm:$0xff]
        %v213 = vld [vmem:[#allocation7 + $0x20] sm:$0xff]
        %v214 = vld [vmem:[#allocation7 + $0x28] sm:$0xff]
        %v215 = vld [vmem:[#allocation7 + $0x30] sm:$0xff]
        %v216 = vld [vmem:[#allocation7 + $0x38] sm:$0xff]
        %v217 = vld [vmem:[#allocation7 + $0x40] sm:$0xff]
        %v218 = vld [vmem:[#allocation7 + $0x48] sm:$0xff]
        %v219 = vld [vmem:[#allocation7 + $0x50] sm:$0xff]
        %v220 = vld [vmem:[#allocation7 + $0x58] sm:$0xff]
        %v221 = vld [vmem:[#allocation7 + $0x60] sm:$0xff]
        %v222 = vld [vmem:[#allocation7 + $0x68] sm:$0xff]
        %v223 = vld [vmem:[#allocation7 + $0x70] sm:$0xff]
        %v224 = vld [vmem:[#allocation7 + $0x78] sm:$0xff]
        %v225 = vld [vmem:[#allocation7 + $0x80] sm:$0xff]
        %v226 = vld [vmem:[#allocation7 + $0x88] sm:$0xff]
        %v227 = vld [vmem:[#allocation7 + $0x90] sm:$0xff]
        %v228 = vld [vmem:[#allocation7 + $0x98] sm:$0xff]
        %v229 = vld [vmem:[#allocation7 + $0xa0] sm:$0xff]
        %v230 = vld [vmem:[#allocation7 + $0xa8] sm:$0xff]
        %v231 = vld [vmem:[#allocation7 + $0xb0] sm:$0xff]
        %v232 = vld [vmem:[#allocation7 + $0xb8] sm:$0xff]
        %v233 = vld [vmem:[#allocation7 + $0xc0] sm:$0xff]
        %v234 = vld [vmem:[#allocation7 + $0xc8] sm:$0xff]
        %v235 = vld [vmem:[#allocation7 + $0xd0] sm:$0xff]
        %v236 = vld [vmem:[#allocation7 + $0xd8] sm:$0xff]
        %v237 = vld [vmem:[#allocation7 + $0xe0] sm:$0xff]
        %v238 = vld [vmem:[#allocation7 + $0xe8] sm:$0xff]
        %v239 = vld [vmem:[#allocation7 + $0xf0] sm:$0xff]
        %v240 = vld [vmem:[#allocation7 + $0xf8] sm:$0xff]
        %v241 = vld [vmem:[#allocation2] sm:$0xf]
        %v242 = vld [vmem:[#allocation3] sm:$0xff]
        %v243 = vld [vmem:[%s173] sm:$0xff]
        %v244 = vld [vmem:[%s173 + $0x8] sm:$0xff]
        %v245 = vld [vmem:[%s173 + $0x10] sm:$0xff]
        %v246 = vld [vmem:[%s173 + $0x18] sm:$0xff]
        %v279 = vunpack.c.l.b16 %v209
        %v280 = vunpack.c.h.b16 %v209
        %v281 = vunpack.c.l.b16 %v210
        %v282 = vunpack.c.h.b16 %v210
        %v283 = vunpack.c.l.b16 %v211
        %v284 = vunpack.c.h.b16 %v211
        %v285 = vunpack.c.l.b16 %v212
        %v286 = vunpack.c.h.b16 %v212
        %v287 = vunpack.c.l.b16 %v213
        %v288 = vunpack.c.h.b16 %v213
        %v289 = vunpack.c.l.b16 %v214
        %v290 = vunpack.c.h.b16 %v214
        %v291 = vunpack.c.l.b16 %v215
        %v292 = vunpack.c.h.b16 %v215
        %v293 = vunpack.c.l.b16 %v216
        %v294 = vunpack.c.h.b16 %v216
        %v295 = vunpack.c.l.b16 %v217
        %v296 = vunpack.c.h.b16 %v217
        %v297 = vunpack.c.l.b16 %v218
        %v298 = vunpack.c.h.b16 %v218
        %v299 = vunpack.c.l.b16 %v219
        %v300 = vunpack.c.h.b16 %v219
        %v301 = vunpack.c.l.b16 %v220
        %v302 = vunpack.c.h.b16 %v220
        %v303 = vunpack.c.l.b16 %v221
        %v304 = vunpack.c.h.b16 %v221
        %v305 = vunpack.c.l.b16 %v222
        %v306 = vunpack.c.h.b16 %v222
        %v307 = vunpack.c.l.b16 %v223
        %v308 = vunpack.c.h.b16 %v223
        %v309 = vunpack.c.l.b16 %v224
        %v310 = vunpack.c.h.b16 %v224
        %v311 = vunpack.c.l.b16 %v225
        %v312 = vunpack.c.h.b16 %v225
        %v313 = vunpack.c.l.b16 %v226
        %v314 = vunpack.c.h.b16 %v226
        %v315 = vunpack.c.l.b16 %v227
        %v316 = vunpack.c.h.b16 %v227
        %v317 = vunpack.c.l.b16 %v228
        %v318 = vunpack.c.h.b16 %v228
        %v319 = vunpack.c.l.b16 %v229
        %v320 = vunpack.c.h.b16 %v229
        %v321 = vunpack.c.l.b16 %v230
        %v322 = vunpack.c.h.b16 %v230
        %v323 = vunpack.c.l.b16 %v231
        %v324 = vunpack.c.h.b16 %v231
        %v325 = vunpack.c.l.b16 %v232
        %v326 = vunpack.c.h.b16 %v232
        %v327 = vunpack.c.l.b16 %v233
        %v328 = vunpack.c.h.b16 %v233
        %v329 = vunpack.c.l.b16 %v234
        %v330 = vunpack.c.h.b16 %v234
        %v331 = vunpack.c.l.b16 %v235
        %v332 = vunpack.c.h.b16 %v235
        %v333 = vunpack.c.l.b16 %v236
        %v334 = vunpack.c.h.b16 %v236
        %v335 = vunpack.c.l.b16 %v237
        %v336 = vunpack.c.h.b16 %v237
        %v337 = vunpack.c.l.b16 %v238
        %v338 = vunpack.c.h.b16 %v238
        %v339 = vunpack.c.l.b16 %v239
        %v340 = vunpack.c.h.b16 %v239
        %v341 = vunpack.c.l.b16 %v240
        %v342 = vunpack.c.h.b16 %v240
        %v343 = vpack.c.b16 %v283, %v279
        %v344 = vpack.c.b16 %v284, %v280
        %v345 = vpack.c.b16 %v285, %v281
        %v346 = vpack.c.b16 %v286, %v282
        %v347 = vpack.c.b16 %v291, %v287
        %v348 = vpack.c.b16 %v292, %v288
        %v349 = vpack.c.b16 %v293, %v289
        %v350 = vpack.c.b16 %v294, %v290
        %v351 = vpack.c.b16 %v299, %v295
        %v352 = vpack.c.b16 %v300, %v296
        %v353 = vpack.c.b16 %v301, %v297
        %v354 = vpack.c.b16 %v302, %v298
        %v355 = vpack.c.b16 %v307, %v303
        %v356 = vpack.c.b16 %v308, %v304
        %v357 = vpack.c.b16 %v309, %v305
        %v358 = vpack.c.b16 %v310, %v306
        %v359 = vpack.c.b16 %v315, %v311
        %v360 = vpack.c.b16 %v316, %v312
        %v361 = vpack.c.b16 %v317, %v313
        %v362 = vpack.c.b16 %v318, %v314
        %v363 = vpack.c.b16 %v323, %v319
        %v364 = vpack.c.b16 %v324, %v320
        %v365 = vpack.c.b16 %v325, %v321
        %v366 = vpack.c.b16 %v326, %v322
        %v367 = vpack.c.b16 %v331, %v327
        %v368 = vpack.c.b16 %v332, %v328
        %v369 = vpack.c.b16 %v333, %v329
        %v370 = vpack.c.b16 %v334, %v330
        %v371 = vpack.c.b16 %v339, %v335
        %v372 = vpack.c.b16 %v340, %v336
        %v373 = vpack.c.b16 %v341, %v337
        %v374 = vpack.c.b16 %v342, %v338
        %407 = vmatpush.bf16.msra.mxu0 %v371
        %408 = vmatpush.bf16.msra.mxu0 %v367
        %409 = vmatpush.bf16.msra.mxu0 %v363
        %410 = vmatpush.bf16.msra.mxu0 %v359
        %411 = vmatpush.bf16.msra.mxu0 %v355
        %412 = vmatpush.bf16.msra.mxu0 %v351
        %413 = vmatpush.bf16.msra.mxu0 %v347
        %414 = vmatpush.bf16.msra.mxu0 %v343
        %415 = vmatmul.bf16.gmra.mxu0 %v241
        %v416 = vpop.f32.mrf.mxu0
        %v417 = vadd.f32 0.0, %v416
        %v418 = vpop.f32.mrf.mxu0
        %419 = vdwg.mxu0
        %420 = vmatpush.bf16.msra.mxu0 %v372
        %421 = vmatpush.bf16.msra.mxu0 %v368
        %422 = vmatpush.bf16.msra.mxu0 %v364
        %423 = vmatpush.bf16.msra.mxu0 %v360
        %424 = vmatpush.bf16.msra.mxu0 %v356
        %425 = vmatpush.bf16.msra.mxu0 %v352
        %426 = vmatpush.bf16.msra.mxu0 %v348
        %427 = vmatpush.bf16.msra.mxu0 %v344
        %428 = vmatmul.bf16.gmra.mxu0 %v241
        %v429 = vpop.f32.mrf.mxu0
        %v430 = vadd.f32 0.0, %v429
        %v431 = vpop.f32.mrf.mxu0
        %432 = vdwg.mxu0
        %433 = vmatpush.bf16.msra.mxu0 %v373
        %434 = vmatpush.bf16.msra.mxu0 %v369
        %435 = vmatpush.bf16.msra.mxu0 %v365
        %436 = vmatpush.bf16.msra.mxu0 %v361
        %437 = vmatpush.bf16.msra.mxu0 %v357
        %438 = vmatpush.bf16.msra.mxu0 %v353
        %439 = vmatpush.bf16.msra.mxu0 %v349
        %440 = vmatpush.bf16.msra.mxu0 %v345
        %441 = vmatmul.bf16.gmra.mxu0 %v241
        %v442 = vpop.f32.mrf.mxu0
        %v443 = vadd.f32 0.0, %v442
        %v444 = vpop.f32.mrf.mxu0
        %445 = vdwg.mxu0
        %446 = vmatpush.bf16.msra.mxu0 %v374
        %447 = vmatpush.bf16.msra.mxu0 %v370
        %448 = vmatpush.bf16.msra.mxu0 %v366
        %449 = vmatpush.bf16.msra.mxu0 %v362
        %450 = vmatpush.bf16.msra.mxu0 %v358
        %451 = vmatpush.bf16.msra.mxu0 %v354
        %452 = vmatpush.bf16.msra.mxu0 %v350
        %453 = vmatpush.bf16.msra.mxu0 %v346
        %454 = vmatmul.bf16.gmra.mxu0 %v241
        %v455 = vpop.f32.mrf.mxu0
        %v456 = vadd.f32 0.0, %v455
        %v457 = vpop.f32.mrf.mxu0
        %458 = vdwg.mxu0
        %v459 = vadd.f32 %v243, %v417
        %v460 = vadd.f32 %v244, %v430
        %v461 = vadd.f32 %v245, %v443
        %v462 = vadd.f32 %v246, %v456
        %v463 = vmul.f32 %v459, 0.5
        %v464 = vtanh.pop %v463
        %v465 = vmul.f32 %v464, 0.5
        %v466 = vadd.f32 %v465, 0.5
        %v467 = vmul.f32 %v460, 0.5
        %v468 = vtanh.pop %v467
        %v469 = vmul.f32 %v468, 0.5
        %v470 = vadd.f32 %v469, 0.5
        %v471 = vtanh.pop %v461
        %v472 = vmul.f32 %v462, 0.5
        %v473 = vtanh.pop %v472
        %v474 = vmul.f32 %v473, 0.5
        %v475 = vadd.f32 %v474, 0.5
        %v476 = vmul.f32 %v470, %v242
        %v477 = vmul.f32 %v466, %v471
        %v478 = vadd.f32 %v476, %v477
        %v479 = vtanh.pop %v478
        %v480 = vmul.f32 %v475, %v479
        %481 = vst [vmem:[%s199] sm:$0xff] %v480
        %v482 = vpack.c.bf16 %v480, %v480
        %s483 = scalar_lea.vmem %s173, 32 [#allocation4]
        %v484 = vld [vmem:[%s483] sm:$0xff]
        %v485 = vld [vmem:[%s483 + $0x8] sm:$0xff]
        %v486 = vld [vmem:[%s483 + $0x10] sm:$0xff]
        %v487 = vld [vmem:[%s483 + $0x18] sm:$0xff]
        %488 = vmatpush.bf16.msra.mxu0 %v371
        %489 = vmatpush.bf16.msra.mxu0 %v367
        %490 = vmatpush.bf16.msra.mxu0 %v363
        %491 = vmatpush.bf16.msra.mxu0 %v359
        %492 = vmatpush.bf16.msra.mxu0 %v355
        %493 = vmatpush.bf16.msra.mxu0 %v351
        %494 = vmatpush.bf16.msra.mxu0 %v347
        %495 = vmatpush.bf16.msra.mxu0 %v343
        %496 = vmatmul.bf16.gmra.mxu0 %v482
        %v497 = vpop.f32.mrf.mxu0
        %v498 = vadd.f32 0.0, %v497
        %v499 = vpop.f32.mrf.mxu0
        %500 = vdwg.mxu0
        %501 = vmatpush.bf16.msra.mxu0 %v372
        %502 = vmatpush.bf16.msra.mxu0 %v368
        %503 = vmatpush.bf16.msra.mxu0 %v364
        %504 = vmatpush.bf16.msra.mxu0 %v360
        %505 = vmatpush.bf16.msra.mxu0 %v356
        %506 = vmatpush.bf16.msra.mxu0 %v352
        %507 = vmatpush.bf16.msra.mxu0 %v348
        %508 = vmatpush.bf16.msra.mxu0 %v344
        %509 = vmatmul.bf16.gmra.mxu0 %v482
        %v510 = vpop.f32.mrf.mxu0
        %v511 = vadd.f32 0.0, %v510
        %v512 = vpop.f32.mrf.mxu0
        %513 = vdwg.mxu0
        %514 = vmatpush.bf16.msra.mxu0 %v373
        %515 = vmatpush.bf16.msra.mxu0 %v369
        %516 = vmatpush.bf16.msra.mxu0 %v365
        %517 = vmatpush.bf16.msra.mxu0 %v361
        %518 = vmatpush.bf16.msra.mxu0 %v357
        %519 = vmatpush.bf16.msra.mxu0 %v353
        %520 = vmatpush.bf16.msra.mxu0 %v349
        %521 = vmatpush.bf16.msra.mxu0 %v345
        %522 = vmatmul.bf16.gmra.mxu0 %v482
        %v523 = vpop.f32.mrf.mxu0
        %v524 = vadd.f32 0.0, %v523
        %v525 = vpop.f32.mrf.mxu0
        %526 = vdwg.mxu0
        %527 = vmatpush.bf16.msra.mxu0 %v374
        %528 = vmatpush.bf16.msra.mxu0 %v370
        %529 = vmatpush.bf16.msra.mxu0 %v366
        %530 = vmatpush.bf16.msra.mxu0 %v362
        %531 = vmatpush.bf16.msra.mxu0 %v358
        %532 = vmatpush.bf16.msra.mxu0 %v354
        %533 = vmatpush.bf16.msra.mxu0 %v350
        %534 = vmatpush.bf16.msra.mxu0 %v346
        %535 = vmatmul.bf16.gmra.mxu0 %v482
        %v536 = vpop.f32.mrf.mxu0
        %v537 = vadd.f32 0.0, %v536
        %v538 = vpop.f32.mrf.mxu0
        %539 = vdwg.mxu0
        %v540 = vadd.f32 %v484, %v498
        %v541 = vadd.f32 %v485, %v511
        %v542 = vadd.f32 %v486, %v524
        %v543 = vadd.f32 %v487, %v537
        %v544 = vmul.f32 %v540, 0.5
        %v545 = vtanh.pop %v544
        %v546 = vmul.f32 %v545, 0.5
        %v547 = vadd.f32 %v546, 0.5
        %v548 = vmul.f32 %v541, 0.5
        %v549 = vtanh.pop %v548
        %v550 = vmul.f32 %v549, 0.5
        %v551 = vadd.f32 %v550, 0.5
        %v552 = vtanh.pop %v542
        %v553 = vmul.f32 %v543, 0.5
        %v554 = vtanh.pop %v553
        %v555 = vmul.f32 %v554, 0.5
        %v556 = vadd.f32 %v555, 0.5
        %v557 = vmul.f32 %v551, %v478
        %v558 = vmul.f32 %v547, %v552
        %v559 = vadd.f32 %v557, %v558
        %v560 = vtanh.pop %v559
        %v561 = vmul.f32 %v556, %v560
        %s562 = scalar_lea.vmem %s199, 8 [#allocation9]
        %563 = vst [vmem:[%s562] sm:$0xff] %v561
        %v564 = vpack.c.bf16 %v561, %v561
        %s565 = scalar_lea.vmem %s173, 64 [#allocation4]
        %v566 = vld [vmem:[%s565] sm:$0xff]
        %v567 = vld [vmem:[%s565 + $0x8] sm:$0xff]
        %v568 = vld [vmem:[%s565 + $0x10] sm:$0xff]
        %v569 = vld [vmem:[%s565 + $0x18] sm:$0xff]
        %570 = vmatpush.bf16.msra.mxu0 %v371
        %571 = vmatpush.bf16.msra.mxu0 %v367
        %572 = vmatpush.bf16.msra.mxu0 %v363
        %573 = vmatpush.bf16.msra.mxu0 %v359
        %574 = vmatpush.bf16.msra.mxu0 %v355
        %575 = vmatpush.bf16.msra.mxu0 %v351
        %576 = vmatpush.bf16.msra.mxu0 %v347
        %577 = vmatpush.bf16.msra.mxu0 %v343
        %578 = vmatmul.bf16.gmra.mxu0 %v564
        %v579 = vpop.f32.mrf.mxu0
        %v580 = vadd.f32 0.0, %v579
        %v581 = vpop.f32.mrf.mxu0
        %582 = vdwg.mxu0
        %583 = vmatpush.bf16.msra.mxu0 %v372
        %584 = vmatpush.bf16.msra.mxu0 %v368
        %585 = vmatpush.bf16.msra.mxu0 %v364
        %586 = vmatpush.bf16.msra.mxu0 %v360
        %587 = vmatpush.bf16.msra.mxu0 %v356
        %588 = vmatpush.bf16.msra.mxu0 %v352
        %589 = vmatpush.bf16.msra.mxu0 %v348
        %590 = vmatpush.bf16.msra.mxu0 %v344
        %591 = vmatmul.bf16.gmra.mxu0 %v564
        %v592 = vpop.f32.mrf.mxu0
        %v593 = vadd.f32 0.0, %v592
        %v594 = vpop.f32.mrf.mxu0
        %595 = vdwg.mxu0
        %596 = vmatpush.bf16.msra.mxu0 %v373
        %597 = vmatpush.bf16.msra.mxu0 %v369
        %598 = vmatpush.bf16.msra.mxu0 %v365
        %599 = vmatpush.bf16.msra.mxu0 %v361
        %600 = vmatpush.bf16.msra.mxu0 %v357
        %601 = vmatpush.bf16.msra.mxu0 %v353
        %602 = vmatpush.bf16.msra.mxu0 %v349
        %603 = vmatpush.bf16.msra.mxu0 %v345
        %604 = vmatmul.bf16.gmra.mxu0 %v564
        %v605 = vpop.f32.mrf.mxu0
        %v606 = vadd.f32 0.0, %v605
        %v607 = vpop.f32.mrf.mxu0
        %608 = vdwg.mxu0
        %609 = vmatpush.bf16.msra.mxu0 %v374
        %610 = vmatpush.bf16.msra.mxu0 %v370
        %611 = vmatpush.bf16.msra.mxu0 %v366
        %612 = vmatpush.bf16.msra.mxu0 %v362
        %613 = vmatpush.bf16.msra.mxu0 %v358
        %614 = vmatpush.bf16.msra.mxu0 %v354
        %615 = vmatpush.bf16.msra.mxu0 %v350
        %616 = vmatpush.bf16.msra.mxu0 %v346
        %617 = vmatmul.bf16.gmra.mxu0 %v564
        %v618 = vpop.f32.mrf.mxu0
        %v619 = vadd.f32 0.0, %v618
        %v620 = vpop.f32.mrf.mxu0
        %621 = vdwg.mxu0
        %v622 = vadd.f32 %v566, %v580
        %v623 = vadd.f32 %v567, %v593
        %v624 = vadd.f32 %v568, %v606
        %v625 = vadd.f32 %v569, %v619
        %v626 = vmul.f32 %v622, 0.5
        %v627 = vtanh.pop %v626
        %v628 = vmul.f32 %v627, 0.5
        %v629 = vadd.f32 %v628, 0.5
        %v630 = vmul.f32 %v623, 0.5
        %v631 = vtanh.pop %v630
        %v632 = vmul.f32 %v631, 0.5
        %v633 = vadd.f32 %v632, 0.5
        %v634 = vtanh.pop %v624
        %v635 = vmul.f32 %v625, 0.5
        %v636 = vtanh.pop %v635
        %v637 = vmul.f32 %v636, 0.5
        %v638 = vadd.f32 %v637, 0.5
        %v639 = vmul.f32 %v633, %v559
        %v640 = vmul.f32 %v629, %v634
        %v641 = vadd.f32 %v639, %v640
        %v642 = vtanh.pop %v641
        %v643 = vmul.f32 %v638, %v642
        %s644 = scalar_lea.vmem %s199, 16 [#allocation9]
        %645 = vst [vmem:[%s644] sm:$0xff] %v643
        %v646 = vpack.c.bf16 %v643, %v643
        %s647 = scalar_lea.vmem %s173, 96 [#allocation4]
        %v648 = vld [vmem:[%s647] sm:$0xff]
        %v649 = vld [vmem:[%s647 + $0x8] sm:$0xff]
        %v650 = vld [vmem:[%s647 + $0x10] sm:$0xff]
        %v651 = vld [vmem:[%s647 + $0x18] sm:$0xff]
        %652 = vmatpush.bf16.msra.mxu0 %v371
        %653 = vmatpush.bf16.msra.mxu0 %v367
        %654 = vmatpush.bf16.msra.mxu0 %v363
        %655 = vmatpush.bf16.msra.mxu0 %v359
        %656 = vmatpush.bf16.msra.mxu0 %v355
        %657 = vmatpush.bf16.msra.mxu0 %v351
        %658 = vmatpush.bf16.msra.mxu0 %v347
        %659 = vmatpush.bf16.msra.mxu0 %v343
        %660 = vmatmul.bf16.gmra.mxu0 %v646
        %v661 = vpop.f32.mrf.mxu0
        %v662 = vadd.f32 0.0, %v661
        %v663 = vpop.f32.mrf.mxu0
        %664 = vdwg.mxu0
        %665 = vmatpush.bf16.msra.mxu0 %v372
        %666 = vmatpush.bf16.msra.mxu0 %v368
        %667 = vmatpush.bf16.msra.mxu0 %v364
        %668 = vmatpush.bf16.msra.mxu0 %v360
        %669 = vmatpush.bf16.msra.mxu0 %v356
        %670 = vmatpush.bf16.msra.mxu0 %v352
        %671 = vmatpush.bf16.msra.mxu0 %v348
        %672 = vmatpush.bf16.msra.mxu0 %v344
        %673 = vmatmul.bf16.gmra.mxu0 %v646
        %v674 = vpop.f32.mrf.mxu0
        %v675 = vadd.f32 0.0, %v674
        %v676 = vpop.f32.mrf.mxu0
        %677 = vdwg.mxu0
        %678 = vmatpush.bf16.msra.mxu0 %v373
        %679 = vmatpush.bf16.msra.mxu0 %v369
        %680 = vmatpush.bf16.msra.mxu0 %v365
        %681 = vmatpush.bf16.msra.mxu0 %v361
        %682 = vmatpush.bf16.msra.mxu0 %v357
        %683 = vmatpush.bf16.msra.mxu0 %v353
        %684 = vmatpush.bf16.msra.mxu0 %v349
        %685 = vmatpush.bf16.msra.mxu0 %v345
        %686 = vmatmul.bf16.gmra.mxu0 %v646
        %v687 = vpop.f32.mrf.mxu0
        %v688 = vadd.f32 0.0, %v687
        %v689 = vpop.f32.mrf.mxu0
        %690 = vdwg.mxu0
        %691 = vmatpush.bf16.msra.mxu0 %v374
        %692 = vmatpush.bf16.msra.mxu0 %v370
        %693 = vmatpush.bf16.msra.mxu0 %v366
        %694 = vmatpush.bf16.msra.mxu0 %v362
        %695 = vmatpush.bf16.msra.mxu0 %v358
        %696 = vmatpush.bf16.msra.mxu0 %v354
        %697 = vmatpush.bf16.msra.mxu0 %v350
        %698 = vmatpush.bf16.msra.mxu0 %v346
        %699 = vmatmul.bf16.gmra.mxu0 %v646
        %v700 = vpop.f32.mrf.mxu0
        %v701 = vadd.f32 0.0, %v700
        %v702 = vpop.f32.mrf.mxu0
        %703 = vdwg.mxu0
        %v704 = vadd.f32 %v648, %v662
        %v705 = vadd.f32 %v649, %v675
        %v706 = vadd.f32 %v650, %v688
        %v707 = vadd.f32 %v651, %v701
        %v708 = vmul.f32 %v704, 0.5
        %v709 = vtanh.pop %v708
        %v710 = vmul.f32 %v709, 0.5
        %v711 = vadd.f32 %v710, 0.5
        %v712 = vmul.f32 %v705, 0.5
        %v713 = vtanh.pop %v712
        %v714 = vmul.f32 %v713, 0.5
        %v715 = vadd.f32 %v714, 0.5
        %v716 = vtanh.pop %v706
        %v717 = vmul.f32 %v707, 0.5
        %v718 = vtanh.pop %v717
        %v719 = vmul.f32 %v718, 0.5
        %v720 = vadd.f32 %v719, 0.5
        %v721 = vmul.f32 %v715, %v641
        %v722 = vmul.f32 %v711, %v716
        %v723 = vadd.f32 %v721, %v722
        %v724 = vtanh.pop %v723
        %v725 = vmul.f32 %v720, %v724
        %s726 = scalar_lea.vmem %s199, 24 [#allocation9]
        %727 = vst [vmem:[%s726] sm:$0xff] %v725
        %v728 = vpack.c.bf16 %v725, %v725
        %729 = vst [vmem:[#allocation2] sm:$0xf] %v728
        %730 = vst [vmem:[#allocation3] sm:$0xff] %v723
        %s731 = sand.u32 %s91, 1
        %s732 = scalar_lea.sflag [#allocation6], %s731
        %s733 = sand.u32 %s91, 1
        %s734 = smul.addr %s733, 32
        %s735 = scalar_lea.vmem [#allocation9], %s734
        // Predicated region
        $region41: #{tpu_custom_call.1} parent=27 // pred_check
          %p736 = pneg %p101
        $region42: #{tpu_custom_call.1} parent=27 // pred_check_branch
          %738 = sbr.rel (%p736) target = $region44
        $region43: #{tpu_custom_call.1} parent=27 // pred_region
          %s739 = smul.u32 4, %s25
          %741 = vsyncadd %s732, 0
          %s742 = sadd.s32 %s24, %s739
          %s743 = smul.addr %s742, 8
          %s744 = scalar_lea.hbm %s2, %s743
          %s745 = sshll.u32 %s735, 4
          %s746 = int_to_ptr.vmem [resolvable:$true] %s745
          %s747 = sshll.u32 %s744, 4
          %s748 = int_to_ptr.hbm [resolvable:$true] %s747
          %753 = dma.vmem_to_hbm [thread:$0]  %s746, 512, %s748, %s732, 128, 128, 8
        $region44: #{tpu_custom_call.1} parent=27 // pred_fallthru
          _
      $region28: #{tpu_custom_call.1} parent=5 // pred_fallthru
        _
      %p754 = scmp.le.s32.totalorder 2, %s15
      // Predicated region
      $region45: #{tpu_custom_call.1} parent=5 // pred_check
        %p755 = pneg %p754
      $region46: #{tpu_custom_call.1} parent=5 // pred_check_branch
        %757 = sbr.rel (%p755) target = $region48
      $region47: #{tpu_custom_call.1} parent=5 // pred_region
        %s758 = ssub.s32 %s15, 2
        // Predicated region
        $region49: #{tpu_custom_call.1} parent=47 // pred_check
          %p759 = pneg %p107
        $region50: #{tpu_custom_call.1} parent=47 // pred_check_branch
          %761 = sbr.rel (%p759) target = $region52
        $region51: #{tpu_custom_call.1} parent=47 // pred_region
          %s762 = sand.u32 %s92, 1
          %s763 = scalar_lea.sflag [#allocation6], %s762
          %s764 = sand.u32 %s92, 1
          %s765 = smul.addr %s764, 32
          %s766 = scalar_lea.vmem [#allocation9], %s765
          %768 = dma.done %s763, 512
        $region52: #{tpu_custom_call.1} parent=47 // pred_fallthru
          _
      $region48: #{tpu_custom_call.1} parent=5 // pred_fallthru
        _
    $region6: #{tpu_custom_call.1} parent=1 // loop_footer
      %s19 = sadd.s32 1, %s15
    $region7: #{tpu_custom_call.1} parent=1 // loop_footer_branch
      %14 = sbr.rel target = $region3
    $region8: #{tpu_custom_call.1} parent=1 // loop_exit
      _
    %769 = vsyncpa [#allocation5], 1
    %s770 = scalar_lea.sflag [#allocation5], 1
    %771 = vsyncpa %s770, 1
    %772 = vsyncpa [#allocation8], 1
    %773 = vsyncpa [#allocation6], 1
    %s774 = scalar_lea.sflag [#allocation6], 1
    %775 = vsyncpa %s774, 1

</llo_original>
